<compile_context>
chip_gen: v6e
topology: v6e:2x2x1
jax: 0.10.0
libtpu: 0.0.40
codegen_flags: <defaults>
</compile_context>

<pallas_src>
import math

import jax
import jax.numpy as jnp
from jax.experimental import pallas as pl
from jax.experimental.pallas import tpu as pltpu


def critic_kernel(x_ref, w1_ref, b1_ref, w2_ref, b2_ref, w3_ref, b3_ref, o_ref):
    # All three layers fused; weights fit entirely in VMEM and are replicated
    # across grid steps (constant block index -> fetched once, kept resident).
    w_dtype = w1_ref.dtype
    x = x_ref[...].astype(w_dtype)  # in-kernel cast (no-op for f32 weights)

    h1 = jnp.dot(x, w1_ref[...], preferred_element_type=jnp.float32) + b1_ref[...]
    h1 = jnp.maximum(h1, 0.0)

    h2 = jnp.dot(h1.astype(w_dtype), w2_ref[...],
                 preferred_element_type=jnp.float32) + b2_ref[...]
    h2 = jnp.maximum(h2, 0.0)

    out = jnp.dot(h2.astype(w_dtype), w3_ref[...],
                  preferred_element_type=jnp.float32) + b3_ref[...]
    o_ref[...] = out.astype(o_ref.dtype)  # unpadded (bm, D_out) store


@jax.jit
def critic_forward(x, params):
    """Fused Critic forward. x: (B, D_in); returns (B, D_out) float32.

    `params` should come from make_params() (f32) or prepare_params() (bf16
    weights, f32 biases) so per-call casting is avoided.
    """
    w1, b1, w2, b2, w3, b3 = params
    B, D_in = x.shape
    H1 = w1.shape[1]
    H2 = w2.shape[1]
    D_out = w3.shape[1]

    # --- batch tiling -------------------------------------------------------
    # Target at most 2 grid steps for small/medium batches (keeps both v7x
    # TensorCores busy via the "parallel" axis; near-single-step on v5e/v6e),
    # capped at 4096 rows per tile. 16-alignment avoids bf16 sublane repack.
    align = 16
    bm = min(4096, max(align, ((pl.cdiv(B, 2) + align - 1) // align) * align))
    B_pad = ((B + bm - 1) // bm) * bm
    if B_pad != B:
        # Fused into the same executable by jit (single dispatch).
        x = jnp.pad(x, ((0, B_pad - B), (0, 0)))
    grid = (B_pad // bm,)

    # --- VMEM budget: ~2x the real footprint --------------------------------
    w_item = jnp.dtype(w1.dtype).itemsize
    x_item = jnp.dtype(x.dtype).itemsize
    x_tile_b = bm * D_in * x_item
    out_tile_b = bm * D_out * 4
    weights_b = (D_in * H1 + H1 * H2 + H2 * D_out) * w_item \
        + (H1 + H2 + D_out) * 4
    interm_b = bm * (H1 + H2 + D_out) * 4 + bm * max(H1, H2, D_in) * w_item
    vmem_needed = 2 * (x_tile_b + out_tile_b) + 2 * weights_b + interm_b
    vmem_limit = int(min(max(2 * vmem_needed, 4 * 1024 * 1024),
                         48 * 1024 * 1024))

    # Weights/biases: constant block index -> not re-DMA'd across grid steps.
    full = lambda shape: pl.BlockSpec(shape, lambda i: (0,) * len(shape))

    out_padded = pl.pallas_call(
        critic_kernel,
        out_shape=jax.ShapeDtypeStruct((B_pad, D_out), jnp.float32),
        grid_spec=pltpu.PrefetchScalarGridSpec(
            num_scalar_prefetch=0,
            grid=grid,
            in_specs=[
                pl.BlockSpec((bm, D_in), lambda i: (i, 0)),
                full((D_in, H1)),
                full((1, H1)),
                full((H1, H2)),
                full((1, H2)),
                full((H2, D_out)),
                full((1, D_out)),
            ],
            out_specs=pl.BlockSpec((bm, D_out), lambda i: (i, 0)),
        ),
        compiler_params=pltpu.CompilerParams(
            dimension_semantics=("parallel",),
            vmem_limit_bytes=vmem_limit,
        ),
    )(x, w1, b1, w2, b2, w3, b3)

    # Padded rows carry ReLU(b1)-propagated values; sliced away here (fused).
    return out_padded[:B] if B_pad != B else out_padded


def prepare_params(params, use_bf16=False):
    """One-time cast of weights (biases stay f32). Cache the result across calls."""
    w1, b1, w2, b2, w3, b3 = params
    w_dtype = jnp.bfloat16 if use_bf16 else jnp.float32
    return (w1.astype(w_dtype), b1.astype(jnp.float32),
            w2.astype(w_dtype), b2.astype(jnp.float32),
            w3.astype(w_dtype), b3.astype(jnp.float32))


# ------------------------- parameter init (matches PyTorch) ------------------
def xavier_uniform(key, fan_in, fan_out):
    # Matches nn.init.xavier_uniform_ semantics (gain=1).
    bound = math.sqrt(6.0 / (fan_in + fan_out))
    # PyTorch weight is (out, in); we generate (in, out) directly (same distribution).
    return jax.random.uniform(key, (fan_in, fan_out), jnp.float32, -bound, bound)


def linear_bias(key, fan_in, fan_out):
    # PyTorch nn.Linear default bias init: U(-1/sqrt(fan_in), 1/sqrt(fan_in)).
    bound = 1.0 / math.sqrt(fan_in)
    return jax.random.uniform(key, (1, fan_out), jnp.float32, -bound, bound)


def make_params(key, input_dim, n_hidden1, n_hidden2, output_dim):
    ks = jax.random.split(key, 6)
    w1 = xavier_uniform(ks[0], input_dim, n_hidden1)
    b1 = linear_bias(ks[1], input_dim, n_hidden1)
    w2 = xavier_uniform(ks[2], n_hidden1, n_hidden2)
    b2 = linear_bias(ks[3], n_hidden1, n_hidden2)
    w3 = xavier_uniform(ks[4], n_hidden2, output_dim)
    b3 = linear_bias(ks[5], n_hidden2, output_dim)
    return (w1, b1, w2, b2, w3, b3)


def critic_ref(x, params):
    w1, b1, w2, b2, w3, b3 = params
    h1 = jnp.maximum(x @ w1 + b1, 0.0)
    h2 = jnp.maximum(h1 @ w2 + b2, 0.0)
    return h2 @ w3 + b3


if __name__ == "__main__":
    key = jax.random.PRNGKey(0)
    k_x, k_p, k_xb = jax.random.split(key, 3)

    batch, input_dim, n_hidden1, n_hidden2, output_dim = 8, 32, 64, 64, 4
    params = make_params(k_p, input_dim, n_hidden1, n_hidden2, output_dim)

    # 1) Small-batch f32 run (single grid step): exact-precision check.
    x = jax.random.normal(k_x, (batch, input_dim), jnp.float32)
    params_f32 = prepare_params(params, use_bf16=False)
    out = jax.block_until_ready(critic_forward(x, params_f32))
    ref = critic_ref(x, params)
    assert out.shape == (batch, output_dim)
    assert jnp.allclose(out, ref, atol=1e-5, rtol=1e-5), "f32 mismatch vs reference"

    # 2) Larger batch with pre-cast bf16 weights: 2-step "parallel" grid (both
    #    TCs on v7x), unpadded lane output, in-kernel x cast. Loose tolerance
    #    for bf16 operand rounding (accumulation stays f32).
    big_batch = 1024
    x_big = jax.random.normal(k_xb, (big_batch, input_dim), jnp.float32)
    params_bf16 = prepare_params(params, use_bf16=True)
    out_big = jax.block_until_ready(critic_forward(x_big, params_bf16))
    ref_big = critic_ref(x_big, params)
    assert out_big.shape == (big_batch, output_dim)
    assert jnp.allclose(out_big, ref_big, atol=1e-1, rtol=1e-1), "bf16 mismatch vs reference"

    print("KERNEL_OK")
</pallas_src>

<mosaic_0001>
module attributes {stable_mosaic.version = 11 : i64} {
  func.func @critic_kernel(%arg0: i32, %arg1: memref<16x32xf32, #tpu.memory_space<vmem>>, %arg2: memref<32x64xf32, #tpu.memory_space<vmem>>, %arg3: memref<1x64xf32, #tpu.memory_space<vmem>>, %arg4: memref<64x64xf32, #tpu.memory_space<vmem>>, %arg5: memref<1x64xf32, #tpu.memory_space<vmem>>, %arg6: memref<64x4xf32, #tpu.memory_space<vmem>>, %arg7: memref<1x4xf32, #tpu.memory_space<vmem>>, %arg8: memref<16x4xf32, #tpu.memory_space<vmem>>) attributes {dimension_semantics = [#tpu.dimension_semantics<parallel>], iteration_bounds = array<i64: 1>, scalar_prefetch = 0 : i64, scratch_operands = 0 : i64, tpu.core_type = #tpu.core_type<tc>, window_params = [{transform_indices = @transform_0, window_bounds = array<i64: 16, 32>}, {pipeline_mode = #tpu.pipeline_mode<synchronous>, transform_indices = @transform_1, window_bounds = array<i64: 32, 64>}, {pipeline_mode = #tpu.pipeline_mode<synchronous>, transform_indices = @transform_2, window_bounds = array<i64: 1, 64>}, {pipeline_mode = #tpu.pipeline_mode<synchronous>, transform_indices = @transform_3, window_bounds = array<i64: 64, 64>}, {pipeline_mode = #tpu.pipeline_mode<synchronous>, transform_indices = @transform_4, window_bounds = array<i64: 1, 64>}, {pipeline_mode = #tpu.pipeline_mode<synchronous>, transform_indices = @transform_5, window_bounds = array<i64: 64, 4>}, {pipeline_mode = #tpu.pipeline_mode<synchronous>, transform_indices = @transform_6, window_bounds = array<i64: 1, 4>}, {transform_indices = @transform_7, window_bounds = array<i64: 16, 4>}]} {
    %c0 = arith.constant 0 : index
    %c0_0 = arith.constant 0 : index
    %0 = vector.load %arg1[%c0, %c0_0] : memref<16x32xf32, #tpu.memory_space<vmem>>, vector<16x32xf32>
    %c0_1 = arith.constant 0 : index
    %c0_2 = arith.constant 0 : index
    %1 = vector.load %arg2[%c0_1, %c0_2] : memref<32x64xf32, #tpu.memory_space<vmem>>, vector<32x64xf32>
    %cst = arith.constant dense<0.000000e+00> : vector<16x64xf32>
    %2 = tpu.matmul %0, %1, %cst {dimension_numbers = #tpu.dot_dimension_numbers<[1], [0], [0], [1], [0, 0, 1, 1], [], []>} : vector<16x32xf32>, vector<32x64xf32>, vector<16x64xf32> -> vector<16x64xf32>
    %c0_3 = arith.constant 0 : index
    %c0_4 = arith.constant 0 : index
    %3 = vector.load %arg3[%c0_3, %c0_4] : memref<1x64xf32, #tpu.memory_space<vmem>>, vector<1x64xf32>
    %4 = vector.broadcast %3 : vector<1x64xf32> to vector<16x64xf32>
    %5 = arith.addf %2, %4 : vector<16x64xf32>
    %cst_5 = arith.constant 0.000000e+00 : f32
    %6 = vector.broadcast %cst_5 : f32 to vector<16x64xf32>
    %7 = arith.maximumf %5, %6 : vector<16x64xf32>
    %c0_6 = arith.constant 0 : index
    %c0_7 = arith.constant 0 : index
    %8 = vector.load %arg4[%c0_6, %c0_7] : memref<64x64xf32, #tpu.memory_space<vmem>>, vector<64x64xf32>
    %cst_8 = arith.constant dense<0.000000e+00> : vector<16x64xf32>
    %9 = tpu.matmul %7, %8, %cst_8 {dimension_numbers = #tpu.dot_dimension_numbers<[1], [0], [0], [1], [0, 0, 1, 1], [], []>} : vector<16x64xf32>, vector<64x64xf32>, vector<16x64xf32> -> vector<16x64xf32>
    %c0_9 = arith.constant 0 : index
    %c0_10 = arith.constant 0 : index
    %10 = vector.load %arg5[%c0_9, %c0_10] : memref<1x64xf32, #tpu.memory_space<vmem>>, vector<1x64xf32>
    %11 = vector.broadcast %10 : vector<1x64xf32> to vector<16x64xf32>
    %12 = arith.addf %9, %11 : vector<16x64xf32>
    %cst_11 = arith.constant 0.000000e+00 : f32
    %13 = vector.broadcast %cst_11 : f32 to vector<16x64xf32>
    %14 = arith.maximumf %12, %13 : vector<16x64xf32>
    %c0_12 = arith.constant 0 : index
    %c0_13 = arith.constant 0 : index
    %15 = vector.load %arg6[%c0_12, %c0_13] : memref<64x4xf32, #tpu.memory_space<vmem>>, vector<64x4xf32>
    %cst_14 = arith.constant dense<0.000000e+00> : vector<16x4xf32>
    %16 = tpu.matmul %14, %15, %cst_14 {dimension_numbers = #tpu.dot_dimension_numbers<[1], [0], [0], [1], [0, 0, 1, 1], [], []>} : vector<16x64xf32>, vector<64x4xf32>, vector<16x4xf32> -> vector<16x4xf32>
    %c0_15 = arith.constant 0 : index
    %c0_16 = arith.constant 0 : index
    %17 = vector.load %arg7[%c0_15, %c0_16] : memref<1x4xf32, #tpu.memory_space<vmem>>, vector<1x4xf32>
    %18 = vector.broadcast %17 : vector<1x4xf32> to vector<16x4xf32>
    %19 = arith.addf %16, %18 : vector<16x4xf32>
    %c0_17 = arith.constant 0 : index
    %c0_18 = arith.constant 0 : index
    %20 = vector.load %arg8[%c0_17, %c0_18] : memref<16x4xf32, #tpu.memory_space<vmem>>, vector<16x4xf32>
    tpu.vector_store %arg8[%c0_17, %c0_18], %19 {strides = array<i32>} : memref<16x4xf32, #tpu.memory_space<vmem>>, vector<16x4xf32>,
    return
  }
  func.func @transform_0(%arg0: i32) -> (i32, i32) {
    %c0_i32 = arith.constant 0 : i32
    %c0_i32_0 = arith.constant 0 : i32
    return %arg0, %c0_i32 : i32, i32
  }
  func.func @transform_1(%arg0: i32) -> (i32, i32) {
    %c0_i32 = arith.constant 0 : i32
    %c0_i32_0 = arith.constant 0 : i32
    %c0_i32_1 = arith.constant 0 : i32
    return %c0_i32, %c0_i32_0 : i32, i32
  }
  func.func @transform_2(%arg0: i32) -> (i32, i32) {
    %c0_i32 = arith.constant 0 : i32
    %c0_i32_0 = arith.constant 0 : i32
    %c0_i32_1 = arith.constant 0 : i32
    return %c0_i32, %c0_i32_0 : i32, i32
  }
  func.func @transform_3(%arg0: i32) -> (i32, i32) {
    %c0_i32 = arith.constant 0 : i32
    %c0_i32_0 = arith.constant 0 : i32
    %c0_i32_1 = arith.constant 0 : i32
    return %c0_i32, %c0_i32_0 : i32, i32
  }
  func.func @transform_4(%arg0: i32) -> (i32, i32) {
    %c0_i32 = arith.constant 0 : i32
    %c0_i32_0 = arith.constant 0 : i32
    %c0_i32_1 = arith.constant 0 : i32
    return %c0_i32, %c0_i32_0 : i32, i32
  }
  func.func @transform_5(%arg0: i32) -> (i32, i32) {
    %c0_i32 = arith.constant 0 : i32
    %c0_i32_0 = arith.constant 0 : i32
    %c0_i32_1 = arith.constant 0 : i32
    return %c0_i32, %c0_i32_0 : i32, i32
  }
  func.func @transform_6(%arg0: i32) -> (i32, i32) {
    %c0_i32 = arith.constant 0 : i32
    %c0_i32_0 = arith.constant 0 : i32
    %c0_i32_1 = arith.constant 0 : i32
    return %c0_i32, %c0_i32_0 : i32, i32
  }
  func.func @transform_7(%arg0: i32) -> (i32, i32) {
    %c0_i32 = arith.constant 0 : i32
    %c0_i32_0 = arith.constant 0 : i32
    return %arg0, %c0_i32 : i32, i32
  }
}

</mosaic_0001>

<llo_original>
// kernel: critic_forward.1
$region0: #{critic_forward.1}
  #allocation0 [shape = 'u32[]', space=smem, size = 0x4, offset = 0x4, fixed_abs, tag = 'smem constant byte address 0x4 - core index']
  #allocation1 [shape = 'u32[144,128]{1,0:T(1,128)}', space=vmem, size = 0x12000, scoped, tag = 'internal scratch']
  %s0 = inlined_call_operand.vmem [shape: f32[16,32], index: 0, kind: input, shape index: {}]
  %s1 = inlined_call_operand.vmem [shape: f32[32,64], index: 1, kind: input, shape index: {}]
  %s2 = inlined_call_operand.hbm [shape: f32[1,64], index: 2, kind: input, shape index: {}]
  %s3 = inlined_call_operand.vmem [shape: f32[64,64], index: 3, kind: input, shape index: {}]
  %s4 = inlined_call_operand.hbm [shape: f32[1,64], index: 4, kind: input, shape index: {}]
  %s5 = inlined_call_operand.vmem [shape: f32[64,4], index: 5, kind: input, shape index: {}]
  %s6 = inlined_call_operand.vmem [shape: f32[1,4], index: 6, kind: input, shape index: {}]
  %s7 = inlined_call_operand.vmem [shape: f32[16,4], index: 7, kind: output, shape index: {}]
  %s8 = sld [smem:[#allocation0]]
  $region46: #{critic_forward.1} parent=0
    _
  %s10 = ssub.s32 1, %s8
  %s11 = scalar_select 0, %s10, %s8
  $region1: #{critic_forward.1} parent=0
    #allocation2 [shape = 'u8[512]{0}', space=vmem, size = 0x400, scoped, tag = 'input window, operand 2, single buffered']
    #allocation3 [shape = 's32[1]{0}', space=sflag, size = 0x4, scoped, tag = 'scoped memory for critic_forward.1']
    #allocation4 [shape = 'u8[512]{0}', space=vmem, size = 0x400, scoped, tag = 'input window, operand 4, single buffered']
    #allocation5 [shape = 's32[1]{0}', space=sflag, size = 0x4, scoped, tag = 'scoped memory for critic_forward.1']
    %12 = vsyncpa [#allocation3], 0
    %13 = vsyncpa [#allocation5], 0
    // Predicated region
    $region2: #{critic_forward.1} parent=1 // pred_check
      _
    $region3: #{critic_forward.1} parent=1 // pred_check_branch
      %15 = sbr.rel (0) target = $region5
    $region4: #{critic_forward.1} parent=1 // pred_region
      _
    $region5: #{critic_forward.1} parent=1 // pred_fallthru
      _
    // Predicated region
    $region6: #{critic_forward.1} parent=1 // pred_check
      _
    $region7: #{critic_forward.1} parent=1 // pred_check_branch
      %17 = sbr.rel (0) target = $region9
    $region8: #{critic_forward.1} parent=1 // pred_region
      _
    $region9: #{critic_forward.1} parent=1 // pred_fallthru
      _
    // Predicated region
    $region10: #{critic_forward.1} parent=1 // pred_check
      _
    $region11: #{critic_forward.1} parent=1 // pred_check_branch
      %19 = sbr.rel (0) target = $region13
    $region12: #{critic_forward.1} parent=1 // pred_region
      %s21 = ssub.s32 16, 16
      %22 = vsyncadd [#allocation3], %s21
      %s24 = sshll.u32 [#allocation2], 4
      %s25 = int_to_ptr.vmem [resolvable:$true] %s24
      %27 = dma.hbm_to_vmem [thread:$0]  %s2, 16, %s25, [#allocation3]
    $region13: #{critic_forward.1} parent=1 // pred_fallthru
      _
    // Predicated region
    $region14: #{critic_forward.1} parent=1 // pred_check
      _
    $region15: #{critic_forward.1} parent=1 // pred_check_branch
      %29 = sbr.rel (0) target = $region17
    $region16: #{critic_forward.1} parent=1 // pred_region
      _
    $region17: #{critic_forward.1} parent=1 // pred_fallthru
      _
    // Predicated region
    $region18: #{critic_forward.1} parent=1 // pred_check
      _
    $region19: #{critic_forward.1} parent=1 // pred_check_branch
      %31 = sbr.rel (0) target = $region21
    $region20: #{critic_forward.1} parent=1 // pred_region
      %s33 = ssub.s32 16, 16
      %34 = vsyncadd [#allocation5], %s33
      %s36 = sshll.u32 [#allocation4], 4
      %s37 = int_to_ptr.vmem [resolvable:$true] %s36
      %39 = dma.hbm_to_vmem [thread:$0]  %s4, 16, %s37, [#allocation5]
    $region21: #{critic_forward.1} parent=1 // pred_fallthru
      _
    // Predicated region
    $region22: #{critic_forward.1} parent=1 // pred_check
      _
    $region23: #{critic_forward.1} parent=1 // pred_check_branch
      %41 = sbr.rel (0) target = $region25
    $region24: #{critic_forward.1} parent=1 // pred_region
      _
    $region25: #{critic_forward.1} parent=1 // pred_fallthru
      _
    // Predicated region
    $region26: #{critic_forward.1} parent=1 // pred_check
      _
    $region27: #{critic_forward.1} parent=1 // pred_check_branch
      %43 = sbr.rel (0) target = $region29
    $region28: #{critic_forward.1} parent=1 // pred_region
      _
    $region29: #{critic_forward.1} parent=1 // pred_fallthru
      _
    // Predicated region
    $region30: #{critic_forward.1} parent=1 // pred_check
      _
    $region31: #{critic_forward.1} parent=1 // pred_check_branch
      %45 = sbr.rel (0) target = $region33
    $region32: #{critic_forward.1} parent=1 // pred_region
      %46 = dma.done [#allocation3], 16
    $region33: #{critic_forward.1} parent=1 // pred_fallthru
      _
    // Predicated region
    $region34: #{critic_forward.1} parent=1 // pred_check
      _
    $region35: #{critic_forward.1} parent=1 // pred_check_branch
      %48 = sbr.rel (0) target = $region37
    $region36: #{critic_forward.1} parent=1 // pred_region
      %49 = dma.done [#allocation5], 16
    $region37: #{critic_forward.1} parent=1 // pred_fallthru
      _
    %v50 = vld [vmem:[%s0] sm:$0xff]
    %v51 = vld [vmem:[%s0 + $0x8] sm:$0xff]
    %v52 = vld [vmem:[%s1] sm:$0xff]
    %v53 = vld [vmem:[%s1 + $0x8] sm:$0xff]
    %v54 = vld [vmem:[%s1 + $0x10] sm:$0xff]
    %v55 = vld [vmem:[%s1 + $0x18] sm:$0xff]
    %v56 = vld [vmem:[#allocation2] sm:$0x1]
    %v58 = vlaneseq
    %v59 = vshrl.u32 %v58, 7
    %v60 = vsub.s32 0, %v59
    %v61 = vrot.slane %v56, %v60
    %vm63 = vcmask 261120
    %v65 = vsel %vm63, %v50, 0
    %v68 = vsel %vm63, %v51, 0
    %70 = vmatprep.subr.mxu0 0.0
    %71 = vmatpush1.msra.mxu0 0.0
    %72 = vmatprep.subr.mxu0 0.0
    %73 = vmatpush1.msra.mxu0 0.0
    %74 = vmatprep.subr.mxu0 0.0
    %75 = vmatpush1.msra.mxu0 0.0
    %76 = vmatprep.subr.mxu0 0.0
    %77 = vmatpush1.msra.mxu0 0.0
    %78 = vmatprep.subr.mxu0 0.0
    %79 = vmatpush1.msra.mxu0 0.0
    %80 = vmatprep.subr.mxu0 0.0
    %81 = vmatpush1.msra.mxu0 0.0
    %82 = vmatprep.subr.mxu0 0.0
    %83 = vmatpush1.msra.mxu0 0.0
    %84 = vmatprep.subr.mxu0 0.0
    %85 = vmatpush1.msra.mxu0 0.0
    %86 = vmatprep.subr.mxu0 0.0
    %87 = vmatpush1.msra.mxu0 0.0
    %88 = vmatprep.subr.mxu0 0.0
    %89 = vmatpush1.msra.mxu0 0.0
    %90 = vmatprep.subr.mxu0 0.0
    %91 = vmatpush1.msra.mxu0 0.0
    %92 = vmatprep.subr.mxu0 0.0
    %93 = vmatpush1.msra.mxu0 0.0
    %94 = vmatprep.subr.mxu0 0.0
    %95 = vmatpush1.msra.mxu0 %v55
    %96 = vmatprep.subr.mxu0 0.0
    %97 = vmatpush1.msra.mxu0 %v54
    %98 = vmatprep.subr.mxu0 0.0
    %99 = vmatpush1.msra.mxu0 %v53
    %100 = vmatprep.subr.mxu0 0.0
    %101 = vmatpush1.msra.mxu0 %v52
    %102 = vmatprep.subr.mxu0 0.0
    %103 = vmatpush2.msra.mxu0 0.0
    %104 = vmatprep.subr.mxu0 0.0
    %105 = vmatpush2.msra.mxu0 0.0
    %106 = vmatprep.subr.mxu0 0.0
    %107 = vmatpush2.msra.mxu0 0.0
    %108 = vmatprep.subr.mxu0 0.0
    %109 = vmatpush2.msra.mxu0 0.0
    %110 = vmatprep.subr.mxu0 0.0
    %111 = vmatpush2.msra.mxu0 0.0
    %112 = vmatprep.subr.mxu0 0.0
    %113 = vmatpush2.msra.mxu0 0.0
    %114 = vmatprep.subr.mxu0 0.0
    %115 = vmatpush2.msra.mxu0 0.0
    %116 = vmatprep.subr.mxu0 0.0
    %117 = vmatpush2.msra.mxu0 0.0
    %118 = vmatprep.subr.mxu0 0.0
    %119 = vmatpush2.msra.mxu0 0.0
    %120 = vmatprep.subr.mxu0 0.0
    %121 = vmatpush2.msra.mxu0 0.0
    %122 = vmatprep.subr.mxu0 0.0
    %123 = vmatpush2.msra.mxu0 0.0
    %124 = vmatprep.subr.mxu0 0.0
    %125 = vmatpush2.msra.mxu0 0.0
    %126 = vmatprep.subr.mxu0 0.0
    %127 = vmatpush2.msra.mxu0 0.0
    %128 = vmatprep.subr.mxu0 0.0
    %129 = vmatpush2.msra.mxu0 0.0
    %130 = vmatprep.subr.mxu0 0.0
    %131 = vmatpush2.msra.mxu0 0.0
    %132 = vmatprep.subr.mxu0 0.0
    %133 = vmatpush2.msra.mxu0 0.0
    %134 = vmatprep.mubr.f32.mxu0 0.0
    %135 = vmatmul.mubr.f32.gmra.mxu0 %v65
    %v136 = vpop.f32.mrf.mxu0
    %v137 = vadd.f32 %v61, %v136
    %v138 = vpop.f32.mrf.mxu0
    %139 = vmatprep.mubr.f32.mxu0 0.0
    %140 = vmatmul.mubr.f32.gmra.mxu0 %v68
    %v141 = vpop.f32.mrf.mxu0
    %v142 = vadd.f32 %v61, %v141
    %v143 = vpop.f32.mrf.mxu0
    %144 = vdwg.mxu0
    %v145 = vmax.f32 %v137, 0.0
    %v146 = vmax.f32 %v142, 0.0
    %v147 = vld [vmem:[%s3] sm:$0xff]
    %v148 = vld [vmem:[%s3 + $0x8] sm:$0xff]
    %v149 = vld [vmem:[%s3 + $0x10] sm:$0xff]
    %v150 = vld [vmem:[%s3 + $0x18] sm:$0xff]
    %v151 = vld [vmem:[%s3 + $0x20] sm:$0xff]
    %v152 = vld [vmem:[%s3 + $0x28] sm:$0xff]
    %v153 = vld [vmem:[%s3 + $0x30] sm:$0xff]
    %v154 = vld [vmem:[%s3 + $0x38] sm:$0xff]
    %v155 = vld [vmem:[#allocation4] sm:$0x1]
    %v157 = vlaneseq
    %v158 = vshrl.u32 %v157, 7
    %v159 = vsub.s32 0, %v158
    %v160 = vrot.slane %v155, %v159
    %vm162 = vcmask 523264
    %v164 = vsel %vm162, %v145, 0
    %v167 = vsel %vm162, %v146, 0
    %169 = vmatprep.subr.mxu0 0.0
    %170 = vmatpush1.msra.mxu0 0.0
    %171 = vmatprep.subr.mxu0 0.0
    %172 = vmatpush1.msra.mxu0 0.0
    %173 = vmatprep.subr.mxu0 0.0
    %174 = vmatpush1.msra.mxu0 0.0
    %175 = vmatprep.subr.mxu0 0.0
    %176 = vmatpush1.msra.mxu0 0.0
    %177 = vmatprep.subr.mxu0 0.0
    %178 = vmatpush1.msra.mxu0 0.0
    %179 = vmatprep.subr.mxu0 0.0
    %180 = vmatpush1.msra.mxu0 0.0
    %181 = vmatprep.subr.mxu0 0.0
    %182 = vmatpush1.msra.mxu0 0.0
    %183 = vmatprep.subr.mxu0 0.0
    %184 = vmatpush1.msra.mxu0 0.0
    %185 = vmatprep.subr.mxu0 0.0
    %186 = vmatpush1.msra.mxu0 %v154
    %187 = vmatprep.subr.mxu0 0.0
    %188 = vmatpush1.msra.mxu0 %v153
    %189 = vmatprep.subr.mxu0 0.0
    %190 = vmatpush1.msra.mxu0 %v152
    %191 = vmatprep.subr.mxu0 0.0
    %192 = vmatpush1.msra.mxu0 %v151
    %193 = vmatprep.subr.mxu0 0.0
    %194 = vmatpush1.msra.mxu0 %v150
    %195 = vmatprep.subr.mxu0 0.0
    %196 = vmatpush1.msra.mxu0 %v149
    %197 = vmatprep.subr.mxu0 0.0
    %198 = vmatpush1.msra.mxu0 %v148
    %199 = vmatprep.subr.mxu0 0.0
    %200 = vmatpush1.msra.mxu0 %v147
    %201 = vmatprep.subr.mxu0 0.0
    %202 = vmatpush2.msra.mxu0 0.0
    %203 = vmatprep.subr.mxu0 0.0
    %204 = vmatpush2.msra.mxu0 0.0
    %205 = vmatprep.subr.mxu0 0.0
    %206 = vmatpush2.msra.mxu0 0.0
    %207 = vmatprep.subr.mxu0 0.0
    %208 = vmatpush2.msra.mxu0 0.0
    %209 = vmatprep.subr.mxu0 0.0
    %210 = vmatpush2.msra.mxu0 0.0
    %211 = vmatprep.subr.mxu0 0.0
    %212 = vmatpush2.msra.mxu0 0.0
    %213 = vmatprep.subr.mxu0 0.0
    %214 = vmatpush2.msra.mxu0 0.0
    %215 = vmatprep.subr.mxu0 0.0
    %216 = vmatpush2.msra.mxu0 0.0
    %217 = vmatprep.subr.mxu0 0.0
    %218 = vmatpush2.msra.mxu0 0.0
    %219 = vmatprep.subr.mxu0 0.0
    %220 = vmatpush2.msra.mxu0 0.0
    %221 = vmatprep.subr.mxu0 0.0
    %222 = vmatpush2.msra.mxu0 0.0
    %223 = vmatprep.subr.mxu0 0.0
    %224 = vmatpush2.msra.mxu0 0.0
    %225 = vmatprep.subr.mxu0 0.0
    %226 = vmatpush2.msra.mxu0 0.0
    %227 = vmatprep.subr.mxu0 0.0
    %228 = vmatpush2.msra.mxu0 0.0
    %229 = vmatprep.subr.mxu0 0.0
    %230 = vmatpush2.msra.mxu0 0.0
    %231 = vmatprep.subr.mxu0 0.0
    %232 = vmatpush2.msra.mxu0 0.0
    %233 = vmatprep.mubr.f32.mxu0 0.0
    %234 = vmatmul.mubr.f32.gmra.mxu0 %v164
    %v235 = vpop.f32.mrf.mxu0
    %v236 = vadd.f32 %v160, %v235
    %v237 = vpop.f32.mrf.mxu0
    %238 = vmatprep.mubr.f32.mxu0 0.0
    %239 = vmatmul.mubr.f32.gmra.mxu0 %v167
    %v240 = vpop.f32.mrf.mxu0
    %v241 = vadd.f32 %v160, %v240
    %v242 = vpop.f32.mrf.mxu0
    %243 = vdwg.mxu0
    %v244 = vmax.f32 %v236, 0.0
    %v245 = vmax.f32 %v241, 0.0
    %v246 = vld [vmem:[%s5] sm:$0xff]
    %v247 = vld [vmem:[%s5 + $0x8] sm:$0xff]
    %v248 = vld [vmem:[%s5 + $0x10] sm:$0xff]
    %v249 = vld [vmem:[%s5 + $0x18] sm:$0xff]
    %v250 = vld [vmem:[%s5 + $0x20] sm:$0xff]
    %v251 = vld [vmem:[%s5 + $0x28] sm:$0xff]
    %v252 = vld [vmem:[%s5 + $0x30] sm:$0xff]
    %v253 = vld [vmem:[%s5 + $0x38] sm:$0xff]
    %v254 = vld [vmem:[%s6] sm:$0x1]
    %v256 = vlaneseq
    %v257 = vshrl.u32 %v256, 7
    %v258 = vsub.s32 0, %v257
    %v259 = vrot.slane %v254, %v258
    %v262 = vsel %vm162, %v244, 0
    %v265 = vsel %vm162, %v245, 0
    %267 = vmatprep.subr.mxu0 0.0
    %268 = vmatpush1.msra.mxu0 0.0
    %269 = vmatprep.subr.mxu0 0.0
    %270 = vmatpush1.msra.mxu0 0.0
    %271 = vmatprep.subr.mxu0 0.0
    %272 = vmatpush1.msra.mxu0 0.0
    %273 = vmatprep.subr.mxu0 0.0
    %274 = vmatpush1.msra.mxu0 0.0
    %275 = vmatprep.subr.mxu0 0.0
    %276 = vmatpush1.msra.mxu0 0.0
    %277 = vmatprep.subr.mxu0 0.0
    %278 = vmatpush1.msra.mxu0 0.0
    %279 = vmatprep.subr.mxu0 0.0
    %280 = vmatpush1.msra.mxu0 0.0
    %281 = vmatprep.subr.mxu0 0.0
    %282 = vmatpush1.msra.mxu0 0.0
    %283 = vmatprep.subr.mxu0 0.0
    %284 = vmatpush1.msra.mxu0 %v253
    %285 = vmatprep.subr.mxu0 0.0
    %286 = vmatpush1.msra.mxu0 %v252
    %287 = vmatprep.subr.mxu0 0.0
    %288 = vmatpush1.msra.mxu0 %v251
    %289 = vmatprep.subr.mxu0 0.0
    %290 = vmatpush1.msra.mxu0 %v250
    %291 = vmatprep.subr.mxu0 0.0
    %292 = vmatpush1.msra.mxu0 %v249
    %293 = vmatprep.subr.mxu0 0.0
    %294 = vmatpush1.msra.mxu0 %v248
    %295 = vmatprep.subr.mxu0 0.0
    %296 = vmatpush1.msra.mxu0 %v247
    %297 = vmatprep.subr.mxu0 0.0
    %298 = vmatpush1.msra.mxu0 %v246
    %299 = vmatprep.subr.mxu0 0.0
    %300 = vmatpush2.msra.mxu0 0.0
    %301 = vmatprep.subr.mxu0 0.0
    %302 = vmatpush2.msra.mxu0 0.0
    %303 = vmatprep.subr.mxu0 0.0
    %304 = vmatpush2.msra.mxu0 0.0
    %305 = vmatprep.subr.mxu0 0.0
    %306 = vmatpush2.msra.mxu0 0.0
    %307 = vmatprep.subr.mxu0 0.0
    %308 = vmatpush2.msra.mxu0 0.0
    %309 = vmatprep.subr.mxu0 0.0
    %310 = vmatpush2.msra.mxu0 0.0
    %311 = vmatprep.subr.mxu0 0.0
    %312 = vmatpush2.msra.mxu0 0.0
    %313 = vmatprep.subr.mxu0 0.0
    %314 = vmatpush2.msra.mxu0 0.0
    %315 = vmatprep.subr.mxu0 0.0
    %316 = vmatpush2.msra.mxu0 0.0
    %317 = vmatprep.subr.mxu0 0.0
    %318 = vmatpush2.msra.mxu0 0.0
    %319 = vmatprep.subr.mxu0 0.0
    %320 = vmatpush2.msra.mxu0 0.0
    %321 = vmatprep.subr.mxu0 0.0
    %322 = vmatpush2.msra.mxu0 0.0
    %323 = vmatprep.subr.mxu0 0.0
    %324 = vmatpush2.msra.mxu0 0.0
    %325 = vmatprep.subr.mxu0 0.0
    %326 = vmatpush2.msra.mxu0 0.0
    %327 = vmatprep.subr.mxu0 0.0
    %328 = vmatpush2.msra.mxu0 0.0
    %329 = vmatprep.subr.mxu0 0.0
    %330 = vmatpush2.msra.mxu0 0.0
    %331 = vmatprep.mubr.f32.mxu0 0.0
    %332 = vmatmul.mubr.f32.gmra.mxu0 %v262
    %v333 = vpop.f32.mrf.mxu0
    %v334 = vadd.f32 %v259, %v333
    %v335 = vpop.f32.mrf.mxu0
    %336 = vmatprep.mubr.f32.mxu0 0.0
    %337 = vmatmul.mubr.f32.gmra.mxu0 %v265
    %v338 = vpop.f32.mrf.mxu0
    %v339 = vadd.f32 %v259, %v338
    %v340 = vpop.f32.mrf.mxu0
    %341 = vdwg.mxu0
    %vm342 = vcmask 31744
    %343 = vst.msk [vmem:[%s7] sm:$0xff] %vm342, %v334
    %344 = vst.msk [vmem:[%s7 + $0x8] sm:$0xff] %vm342, %v339
    // Predicated region
    $region38: #{critic_forward.1} parent=1 // pred_check
      _
    $region39: #{critic_forward.1} parent=1 // pred_check_branch
      %346 = sbr.rel (0) target = $region41
    $region40: #{critic_forward.1} parent=1 // pred_region
      _
    $region41: #{critic_forward.1} parent=1 // pred_fallthru
      _
    // Predicated region
    $region42: #{critic_forward.1} parent=1 // pred_check
      _
    $region43: #{critic_forward.1} parent=1 // pred_check_branch
      %348 = sbr.rel (0) target = $region45
    $region44: #{critic_forward.1} parent=1 // pred_region
      _
    $region45: #{critic_forward.1} parent=1 // pred_fallthru
      _
    %349 = vsyncpa [#allocation3], 1
    %350 = vsyncpa [#allocation5], 1

</llo_original>
